<compile_context>
chip_gen: v6e
topology: v6e:2x2x1
jax: 0.10.0
libtpu: 0.0.40
codegen_flags: <defaults>
</compile_context>

<pallas_src>
import jax
import jax.numpy as jnp
from jax import lax
from jax.experimental import pallas as pl
from jax.experimental.pallas import tpu as pltpu


def dnn_kernel(x_ref, w1_ref, b1_ref, w2_ref, b2_ref, w3_ref, b3_ref, o_ref):
    # fc1 + ReLU (dropout1 == identity at inference). x arrives as f32 and is
    # cast to bf16 per-tile on the VPU (single HBM read of x instead of a
    # separate wrapper-side cast pass). MXU accumulates in f32.
    x = x_ref[...].astype(jnp.bfloat16)
    h1 = jnp.dot(x, w1_ref[...], preferred_element_type=jnp.float32)
    h1 = jnp.maximum(h1 + b1_ref[...], 0.0)

    # fc2 + ReLU (dropout2 == identity at inference).
    h2 = jnp.dot(h1.astype(w2_ref.dtype), w2_ref[...],
                 preferred_element_type=jnp.float32)
    h2 = jnp.maximum(h2 + b2_ref[...], 0.0)

    # fc3 (out_features=1): contract the (1, H2) f32 weight row against h2's
    # feature dim -> (1, TB) lane-dense logits row (dense stores / writeback
    # DMA), instead of a (TB, 1) masked-store column.
    logits = lax.dot_general(
        w3_ref[...], h2,
        dimension_numbers=(((1,), (1,)), ((), ())),
        preferred_element_type=jnp.float32) + b3_ref[...]
    o_ref[...] = jax.nn.sigmoid(logits).astype(o_ref.dtype)


def dnn_forward(x, params, *, block_b=4096):
    """Fused DNN forward. Weights are [in, out] so the kernel does x @ W + b."""
    w1, b1, w2, b2, w3, b3 = params
    B, IN = x.shape
    H1 = w1.shape[1]          # 128
    H2 = w2.shape[1]          # 64

    def round_up(v, m):
        return (v + m - 1) // m * m

    # Batch tile: multiple of 128 so the lane-dense (1, TB) output block obeys
    # the (8,128) layout rule, capped at ~half the batch (rounded up) so the
    # grid has >= 2 steps when the batch is large (v7x megacore sharding).
    # No padding of x: the grid uses pl.cdiv and the partial last block is
    # masked by Pallas (per-row independence makes the garbage rows harmless).
    TB = min(round_up(block_b, 128), round_up(pl.cdiv(B, 2), 128))
    grid = (pl.cdiv(B, TB),)

    # One-time tiny weight casts stay in the wrapper; x stays f32.
    w1_c = w1.astype(jnp.bfloat16)
    w2_c = w2.astype(jnp.bfloat16)
    b1_r = jnp.asarray(b1, jnp.float32).reshape(1, H1)
    b2_r = jnp.asarray(b2, jnp.float32).reshape(1, H2)
    w3_row = jnp.asarray(w3, jnp.float32).reshape(1, H2)
    b3_s = jnp.asarray(b3, jnp.float32).reshape(1, 1)

    out = pl.pallas_call(
        dnn_kernel,
        out_shape=jax.ShapeDtypeStruct((1, B), jnp.float32),
        grid=grid,
        in_specs=[
            pl.BlockSpec((TB, IN), lambda i: (i, 0)),   # x: streamed per tile
            pl.BlockSpec((IN, H1), lambda i: (0, 0)),   # w1: VMEM-resident
            pl.BlockSpec((1, H1),  lambda i: (0, 0)),   # b1
            pl.BlockSpec((H1, H2), lambda i: (0, 0)),   # w2
            pl.BlockSpec((1, H2),  lambda i: (0, 0)),   # b2
            pl.BlockSpec((1, H2),  lambda i: (0, 0)),   # w3 (as a row)
            pl.BlockSpec((1, 1),   lambda i: (0, 0)),   # b3
        ],
        out_specs=pl.BlockSpec((1, TB), lambda i: (0, i)),
        compiler_params=pltpu.CompilerParams(
            dimension_semantics=("parallel",)),
    )(x.astype(jnp.float32), w1_c, b1_r, w2_c, b2_r, w3_row, b3_s)
    return out.reshape(B, 1)


def init_params(key, input_size):
    # Deterministic synthetic init (PyTorch-style uniform bounds), weights
    # stored as [in, out] so the kernel computes x @ W + b.
    ks = jax.random.split(key, 6)

    def linear(kw, kb, fan_in, fan_out):
        bound = 1.0 / jnp.sqrt(fan_in)
        w = jax.random.uniform(kw, (fan_in, fan_out), jnp.float32, -bound, bound)
        b = jax.random.uniform(kb, (1, fan_out), jnp.float32, -bound, bound)
        return w, b

    w1, b1 = linear(ks[0], ks[1], input_size, 128)
    w2, b2 = linear(ks[2], ks[3], 128, 64)
    w3, b3 = linear(ks[4], ks[5], 64, 1)
    return (w1, b1, w2, b2, w3, b3)


if __name__ == "__main__":
    key = jax.random.PRNGKey(0)
    k_x, k_p = jax.random.split(key)

    # Small demo shapes (batch not a multiple of the tile, to exercise the
    # partial-last-block path). Default block_b is used — never a tiny tile.
    batch, input_size = 70, 32
    x = jax.random.normal(k_x, (batch, input_size), jnp.float32)
    params = init_params(k_p, input_size)

    out = dnn_forward(x, params)
    jax.block_until_ready(out)

    # Reference in plain JAX, mirroring the kernel's bf16-operand / f32-acc math.
    w1, b1, w2, b2, w3, b3 = params
    h = jnp.dot(x.astype(jnp.bfloat16), w1.astype(jnp.bfloat16),
                preferred_element_type=jnp.float32)
    h = jnp.maximum(h + b1.reshape(1, -1), 0.0)
    h = jnp.dot(h.astype(jnp.bfloat16), w2.astype(jnp.bfloat16),
                preferred_element_type=jnp.float32)
    h = jnp.maximum(h + b2.reshape(1, -1), 0.0)
    ref = jax.nn.sigmoid(
        jnp.dot(h, w3.reshape(-1, 1), preferred_element_type=jnp.float32)
        + b3.reshape(1, 1))

    assert out.shape == (batch, 1)
    assert jnp.allclose(out, ref, atol=1e-4, rtol=1e-4), (
        float(jnp.max(jnp.abs(out - ref))))

    print("KERNEL_OK")
</pallas_src>

<mosaic_0001>
module attributes {stable_mosaic.version = 11 : i64} {
  func.func @dnn_kernel(%arg0: i32, %arg1: memref<128x32xf32, #tpu.memory_space<vmem>>, %arg2: memref<32x128xbf16, #tpu.memory_space<vmem>>, %arg3: memref<1x128xf32, #tpu.memory_space<vmem>>, %arg4: memref<128x64xbf16, #tpu.memory_space<vmem>>, %arg5: memref<1x64xf32, #tpu.memory_space<vmem>>, %arg6: memref<1x64xf32, #tpu.memory_space<vmem>>, %arg7: memref<1x1xf32, #tpu.memory_space<vmem>>, %arg8: memref<1x128xf32, #tpu.memory_space<vmem>>) attributes {dimension_semantics = [#tpu.dimension_semantics<parallel>], iteration_bounds = array<i64: 1>, scalar_prefetch = 0 : i64, scratch_operands = 0 : i64, tpu.core_type = #tpu.core_type<tc>, window_params = [{transform_indices = @transform_0, window_bounds = array<i64: 128, 32>}, {pipeline_mode = #tpu.pipeline_mode<synchronous>, transform_indices = @transform_1, window_bounds = array<i64: 32, 128>}, {pipeline_mode = #tpu.pipeline_mode<synchronous>, transform_indices = @transform_2, window_bounds = array<i64: 1, 128>}, {pipeline_mode = #tpu.pipeline_mode<synchronous>, transform_indices = @transform_3, window_bounds = array<i64: 128, 64>}, {pipeline_mode = #tpu.pipeline_mode<synchronous>, transform_indices = @transform_4, window_bounds = array<i64: 1, 64>}, {pipeline_mode = #tpu.pipeline_mode<synchronous>, transform_indices = @transform_5, window_bounds = array<i64: 1, 64>}, {pipeline_mode = #tpu.pipeline_mode<synchronous>, transform_indices = @transform_6, window_bounds = array<i64: 1, 1>}, {transform_indices = @transform_7, window_bounds = array<i64: 1, 128>}]} {
    %c0 = arith.constant 0 : index
    %c0_0 = arith.constant 0 : index
    %0 = vector.load %arg1[%c0, %c0_0] : memref<128x32xf32, #tpu.memory_space<vmem>>, vector<128x32xf32>
    %1 = arith.truncf %0 : vector<128x32xf32> to vector<128x32xbf16>
    %c0_1 = arith.constant 0 : index
    %c0_2 = arith.constant 0 : index
    %2 = vector.load %arg2[%c0_1, %c0_2] : memref<32x128xbf16, #tpu.memory_space<vmem>>, vector<32x128xbf16>
    %cst = arith.constant dense<0.000000e+00> : vector<128x128xf32>
    %3 = tpu.matmul %1, %2, %cst {dimension_numbers = #tpu.dot_dimension_numbers<[1], [0], [0], [1], [0, 0, 1, 1], [], []>} : vector<128x32xbf16>, vector<32x128xbf16>, vector<128x128xf32> -> vector<128x128xf32>
    %c0_3 = arith.constant 0 : index
    %c0_4 = arith.constant 0 : index
    %4 = vector.load %arg3[%c0_3, %c0_4] : memref<1x128xf32, #tpu.memory_space<vmem>>, vector<1x128xf32>
    %5 = vector.broadcast %4 : vector<1x128xf32> to vector<128x128xf32>
    %6 = arith.addf %3, %5 : vector<128x128xf32>
    %cst_5 = arith.constant 0.000000e+00 : f32
    %7 = vector.broadcast %cst_5 : f32 to vector<128x128xf32>
    %8 = arith.maximumf %6, %7 : vector<128x128xf32>
    %9 = arith.truncf %8 : vector<128x128xf32> to vector<128x128xbf16>
    %c0_6 = arith.constant 0 : index
    %c0_7 = arith.constant 0 : index
    %10 = vector.load %arg4[%c0_6, %c0_7] : memref<128x64xbf16, #tpu.memory_space<vmem>>, vector<128x64xbf16>
    %cst_8 = arith.constant dense<0.000000e+00> : vector<128x64xf32>
    %11 = tpu.matmul %9, %10, %cst_8 {dimension_numbers = #tpu.dot_dimension_numbers<[1], [0], [0], [1], [0, 0, 1, 1], [], []>} : vector<128x128xbf16>, vector<128x64xbf16>, vector<128x64xf32> -> vector<128x64xf32>
    %c0_9 = arith.constant 0 : index
    %c0_10 = arith.constant 0 : index
    %12 = vector.load %arg5[%c0_9, %c0_10] : memref<1x64xf32, #tpu.memory_space<vmem>>, vector<1x64xf32>
    %13 = vector.broadcast %12 : vector<1x64xf32> to vector<128x64xf32>
    %14 = arith.addf %11, %13 : vector<128x64xf32>
    %cst_11 = arith.constant 0.000000e+00 : f32
    %15 = vector.broadcast %cst_11 : f32 to vector<128x64xf32>
    %16 = arith.maximumf %14, %15 : vector<128x64xf32>
    %c0_12 = arith.constant 0 : index
    %c0_13 = arith.constant 0 : index
    %17 = vector.load %arg6[%c0_12, %c0_13] : memref<1x64xf32, #tpu.memory_space<vmem>>, vector<1x64xf32>
    %cst_14 = arith.constant dense<0.000000e+00> : vector<1x128xf32>
    %18 = tpu.matmul %17, %16, %cst_14 {dimension_numbers = #tpu.dot_dimension_numbers<[1], [1], [0], [0], [0, 0, 1, 0], [], []>} : vector<1x64xf32>, vector<128x64xf32>, vector<1x128xf32> -> vector<1x128xf32>
    %c0_15 = arith.constant 0 : index
    %c0_16 = arith.constant 0 : index
    %19 = vector.load %arg7[%c0_15, %c0_16] : memref<1x1xf32, #tpu.memory_space<vmem>>, vector<1x1xf32>
    %20 = vector.broadcast %19 : vector<1x1xf32> to vector<1x128xf32>
    %21 = arith.addf %18, %20 : vector<1x128xf32>
    %22 = arith.negf %21 : vector<1x128xf32>
    %23 = math.exp %22 : vector<1x128xf32>
    %cst_17 = arith.constant 1.000000e+00 : f32
    %24 = vector.broadcast %cst_17 : f32 to vector<1x128xf32>
    %25 = arith.addf %24, %23 : vector<1x128xf32>
    %26 = arith.divf %24, %25 : vector<1x128xf32>
    %c0_18 = arith.constant 0 : index
    %c0_19 = arith.constant 0 : index
    %27 = vector.load %arg8[%c0_18, %c0_19] : memref<1x128xf32, #tpu.memory_space<vmem>>, vector<1x128xf32>
    tpu.vector_store %arg8[%c0_18, %c0_19], %26 {strides = array<i32>} : memref<1x128xf32, #tpu.memory_space<vmem>>, vector<1x128xf32>,
    return
  }
  func.func @transform_0(%arg0: i32) -> (i32, i32) {
    %c0_i32 = arith.constant 0 : i32
    %c0_i32_0 = arith.constant 0 : i32
    return %arg0, %c0_i32 : i32, i32
  }
  func.func @transform_1(%arg0: i32) -> (i32, i32) {
    %c0_i32 = arith.constant 0 : i32
    %c0_i32_0 = arith.constant 0 : i32
    %c0_i32_1 = arith.constant 0 : i32
    return %c0_i32, %c0_i32_0 : i32, i32
  }
  func.func @transform_2(%arg0: i32) -> (i32, i32) {
    %c0_i32 = arith.constant 0 : i32
    %c0_i32_0 = arith.constant 0 : i32
    %c0_i32_1 = arith.constant 0 : i32
    return %c0_i32, %c0_i32_0 : i32, i32
  }
  func.func @transform_3(%arg0: i32) -> (i32, i32) {
    %c0_i32 = arith.constant 0 : i32
    %c0_i32_0 = arith.constant 0 : i32
    %c0_i32_1 = arith.constant 0 : i32
    return %c0_i32, %c0_i32_0 : i32, i32
  }
  func.func @transform_4(%arg0: i32) -> (i32, i32) {
    %c0_i32 = arith.constant 0 : i32
    %c0_i32_0 = arith.constant 0 : i32
    %c0_i32_1 = arith.constant 0 : i32
    return %c0_i32, %c0_i32_0 : i32, i32
  }
  func.func @transform_5(%arg0: i32) -> (i32, i32) {
    %c0_i32 = arith.constant 0 : i32
    %c0_i32_0 = arith.constant 0 : i32
    %c0_i32_1 = arith.constant 0 : i32
    return %c0_i32, %c0_i32_0 : i32, i32
  }
  func.func @transform_6(%arg0: i32) -> (i32, i32) {
    %c0_i32 = arith.constant 0 : i32
    %c0_i32_0 = arith.constant 0 : i32
    %c0_i32_1 = arith.constant 0 : i32
    return %c0_i32, %c0_i32_0 : i32, i32
  }
  func.func @transform_7(%arg0: i32) -> (i32, i32) {
    %c0_i32 = arith.constant 0 : i32
    %c0_i32_0 = arith.constant 0 : i32
    return %c0_i32, %arg0 : i32, i32
  }
}

</mosaic_0001>

<llo_original>
// kernel: tpu_custom_call.1
$region0: #{tpu_custom_call.1}
  #allocation0 [shape = 'u32[]', space=smem, size = 0x4, offset = 0x4, fixed_abs, tag = 'smem constant byte address 0x4 - core index']
  #allocation1 [shape = 'u32[144,128]{1,0:T(1,128)}', space=vmem, size = 0x12000, scoped, tag = 'internal scratch']
  #allocation2 [shape = 'f32[1,1]{1,0:T(1,128)S(1)}', space=vmem, size = 0x200, scoped, tag = 'scoped memory for tpu_custom_call.1']
  %s0 = inlined_call_operand.vmem [shape: f32[70,32], index: 0, kind: input, shape index: {}]
  %s1 = inlined_call_operand.vmem [shape: bf16[32,128], index: 1, kind: input, shape index: {}]
  %s2 = inlined_call_operand.vmem [shape: f32[1,128], index: 2, kind: input, shape index: {}]
  %s3 = inlined_call_operand.vmem [shape: bf16[128,64], index: 3, kind: input, shape index: {}]
  %s4 = inlined_call_operand.vmem [shape: f32[1,64], index: 4, kind: input, shape index: {}]
  %s5 = inlined_call_operand.vmem [shape: f32[1,64], index: 5, kind: input, shape index: {}]
  %s6 = inlined_call_operand.<no memory space> [shape: f32[1,1], index: 6, kind: input, shape index: {}]
  %s7 = inlined_call_operand.hbm [shape: f32[1,70], index: 7, kind: output, shape index: {}]
  %s8 = sld [smem:[#allocation0]]
  $region38: #{tpu_custom_call.1} parent=0
    _
  %s10 = ssub.s32 1, %s8
  %s11 = scalar_select 0, %s10, %s8
  %v12 = vstv %s6
  %13 = vst [vmem:[#allocation2] sm:$0x1] %v12
  $region1: #{tpu_custom_call.1} parent=0
    #allocation3 [shape = 'u8[512]{0}', space=vmem, size = 0x400, scoped, tag = 'output window, operand 0, single buffered']
    #allocation4 [shape = 's32[1]{0}', space=sflag, size = 0x4, scoped, tag = 'scoped memory for tpu_custom_call.1']
    %14 = vsyncpa [#allocation4], 0
    // Predicated region
    $region2: #{tpu_custom_call.1} parent=1 // pred_check
      _
    $region3: #{tpu_custom_call.1} parent=1 // pred_check_branch
      %16 = sbr.rel (0) target = $region5
    $region4: #{tpu_custom_call.1} parent=1 // pred_region
      _
    $region5: #{tpu_custom_call.1} parent=1 // pred_fallthru
      _
    // Predicated region
    $region6: #{tpu_custom_call.1} parent=1 // pred_check
      _
    $region7: #{tpu_custom_call.1} parent=1 // pred_check_branch
      %18 = sbr.rel (0) target = $region9
    $region8: #{tpu_custom_call.1} parent=1 // pred_region
      _
    $region9: #{tpu_custom_call.1} parent=1 // pred_fallthru
      _
    // Predicated region
    $region10: #{tpu_custom_call.1} parent=1 // pred_check
      _
    $region11: #{tpu_custom_call.1} parent=1 // pred_check_branch
      %20 = sbr.rel (0) target = $region13
    $region12: #{tpu_custom_call.1} parent=1 // pred_region
      _
    $region13: #{tpu_custom_call.1} parent=1 // pred_fallthru
      _
    // Predicated region
    $region14: #{tpu_custom_call.1} parent=1 // pred_check
      _
    $region15: #{tpu_custom_call.1} parent=1 // pred_check_branch
      %22 = sbr.rel (0) target = $region17
    $region16: #{tpu_custom_call.1} parent=1 // pred_region
      _
    $region17: #{tpu_custom_call.1} parent=1 // pred_fallthru
      _
    // Predicated region
    $region18: #{tpu_custom_call.1} parent=1 // pred_check
      _
    $region19: #{tpu_custom_call.1} parent=1 // pred_check_branch
      %24 = sbr.rel (0) target = $region21
    $region20: #{tpu_custom_call.1} parent=1 // pred_region
      _
    $region21: #{tpu_custom_call.1} parent=1 // pred_fallthru
      _
    // Predicated region
    $region22: #{tpu_custom_call.1} parent=1 // pred_check
      _
    $region23: #{tpu_custom_call.1} parent=1 // pred_check_branch
      %26 = sbr.rel (0) target = $region25
    $region24: #{tpu_custom_call.1} parent=1 // pred_region
      _
    $region25: #{tpu_custom_call.1} parent=1 // pred_fallthru
      _
    // Predicated region
    $region26: #{tpu_custom_call.1} parent=1 // pred_check
      _
    $region27: #{tpu_custom_call.1} parent=1 // pred_check_branch
      %28 = sbr.rel (0) target = $region29
    $region28: #{tpu_custom_call.1} parent=1 // pred_region
      _
    $region29: #{tpu_custom_call.1} parent=1 // pred_fallthru
      _
    %v30 = vld [vmem:[%s0] sm:$0xff]
    %v31 = vld [vmem:[%s0 + $0x8] sm:$0xff]
    %v32 = vld [vmem:[%s0 + $0x10] sm:$0xff]
    %v33 = vld [vmem:[%s0 + $0x18] sm:$0xff]
    %v34 = vld [vmem:[%s0 + $0x20] sm:$0xff]
    %v35 = vld [vmem:[%s0 + $0x28] sm:$0xff]
    %v36 = vld [vmem:[%s0 + $0x30] sm:$0xff]
    %v37 = vld [vmem:[%s0 + $0x38] sm:$0xff]
    %v38 = vld [vmem:[%s0 + $0x40] sm:$0xff]
    %v39 = vld [vmem:[%s0 + $0x48] sm:$0xff]
    %v40 = vld [vmem:[%s0 + $0x50] sm:$0xff]
    %v41 = vld [vmem:[%s0 + $0x58] sm:$0xff]
    %v42 = vld [vmem:[%s0 + $0x60] sm:$0xff]
    %v43 = vld [vmem:[%s0 + $0x68] sm:$0xff]
    %v44 = vld [vmem:[%s0 + $0x70] sm:$0xff]
    %v45 = vld [vmem:[%s0 + $0x78] sm:$0xff]
    %v46 = vpack.c.bf16 %v31, %v30
    %v47 = vpack.c.bf16 %v33, %v32
    %v48 = vpack.c.bf16 %v35, %v34
    %v49 = vpack.c.bf16 %v37, %v36
    %v50 = vpack.c.bf16 %v39, %v38
    %v51 = vpack.c.bf16 %v41, %v40
    %v52 = vpack.c.bf16 %v43, %v42
    %v53 = vpack.c.bf16 %v45, %v44
    %v54 = vld [vmem:[%s1] sm:$0xf]
    %v55 = vld [vmem:[%s1 + $0x4] sm:$0xf]
    %v56 = vld [vmem:[%s1 + $0x8] sm:$0xf]
    %v57 = vld [vmem:[%s1 + $0xc] sm:$0xf]
    %v58 = vld [vmem:[%s2] sm:$0x1]
    %v60 = vlaneseq
    %v61 = vshrl.u32 %v60, 7
    %v62 = vsub.s32 0, %v61
    %v63 = vrot.slane %v58, %v62
    %v69 = vunpack.c.l.b16 %v54
    %v70 = vunpack.c.l.b16 %v55
    %v71 = vunpack.c.l.b16 %v56
    %v72 = vunpack.c.l.b16 %v57
    %v73 = vpack.c.b16 %v70, %v69
    %v74 = vpack.c.b16 %v72, %v71
    %vm77 = vcmask 261120
    %v79 = vsel %vm77, %v46, 0
    %v82 = vsel %vm77, %v47, 0
    %v85 = vsel %vm77, %v48, 0
    %v88 = vsel %vm77, %v49, 0
    %v91 = vsel %vm77, %v50, 0
    %v94 = vsel %vm77, %v51, 0
    %v97 = vsel %vm77, %v52, 0
    %v100 = vsel %vm77, %v53, 0
    %102 = vmatprep.subr.bf16.mxu0 0
    %103 = vmatpush1.bf16.msra.mxu0 0
    %104 = vmatprep.subr.bf16.mxu0 0
    %105 = vmatpush1.bf16.msra.mxu0 0
    %106 = vmatprep.subr.bf16.mxu0 0
    %107 = vmatpush1.bf16.msra.mxu0 0
    %108 = vmatprep.subr.bf16.mxu0 0
    %109 = vmatpush1.bf16.msra.mxu0 0
    %110 = vmatprep.subr.bf16.mxu0 0
    %111 = vmatpush1.bf16.msra.mxu0 0
    %112 = vmatprep.subr.bf16.mxu0 0
    %113 = vmatpush1.bf16.msra.mxu0 0
    %114 = vmatprep.subr.bf16.mxu0 0
    %115 = vmatpush1.bf16.msra.mxu0 %v74
    %116 = vmatprep.subr.bf16.mxu0 0
    %117 = vmatpush1.bf16.msra.mxu0 %v73
    %118 = vmatprep.subr.bf16.mxu0 0
    %119 = vmatpush2.bf16.msra.mxu0 0
    %120 = vmatprep.subr.bf16.mxu0 0
    %121 = vmatpush2.bf16.msra.mxu0 0
    %122 = vmatprep.subr.bf16.mxu0 0
    %123 = vmatpush2.bf16.msra.mxu0 0
    %124 = vmatprep.subr.bf16.mxu0 0
    %125 = vmatpush2.bf16.msra.mxu0 0
    %126 = vmatprep.subr.bf16.mxu0 0
    %127 = vmatpush2.bf16.msra.mxu0 0
    %128 = vmatprep.subr.bf16.mxu0 0
    %129 = vmatpush2.bf16.msra.mxu0 0
    %130 = vmatprep.subr.bf16.mxu0 0
    %131 = vmatpush2.bf16.msra.mxu0 0
    %132 = vmatprep.subr.bf16.mxu0 0
    %133 = vmatpush2.bf16.msra.mxu0 0
    %134 = vmatprep.mubr.bf16.mxu0 0
    %135 = vmatmul.mubr.bf16.gmra.mxu0 %v79
    %v136 = vpop.f32.mrf.mxu0
    %v137 = vadd.f32 %v63, %v136
    %v138 = vpop.f32.mrf.mxu0
    %v139 = vpop.f32.mrf.mxu0
    %v140 = vadd.f32 %v63, %v139
    %v141 = vpop.f32.mrf.mxu0
    %142 = vmatprep.mubr.bf16.mxu0 0
    %143 = vmatmul.mubr.bf16.gmra.mxu0 %v82
    %v144 = vpop.f32.mrf.mxu0
    %v145 = vadd.f32 %v63, %v144
    %v146 = vpop.f32.mrf.mxu0
    %v147 = vpop.f32.mrf.mxu0
    %v148 = vadd.f32 %v63, %v147
    %v149 = vpop.f32.mrf.mxu0
    %150 = vmatprep.mubr.bf16.mxu0 0
    %151 = vmatmul.mubr.bf16.gmra.mxu0 %v85
    %v152 = vpop.f32.mrf.mxu0
    %v153 = vadd.f32 %v63, %v152
    %v154 = vpop.f32.mrf.mxu0
    %v155 = vpop.f32.mrf.mxu0
    %v156 = vadd.f32 %v63, %v155
    %v157 = vpop.f32.mrf.mxu0
    %158 = vmatprep.mubr.bf16.mxu0 0
    %159 = vmatmul.mubr.bf16.gmra.mxu0 %v88
    %v160 = vpop.f32.mrf.mxu0
    %v161 = vadd.f32 %v63, %v160
    %v162 = vpop.f32.mrf.mxu0
    %v163 = vpop.f32.mrf.mxu0
    %v164 = vadd.f32 %v63, %v163
    %v165 = vpop.f32.mrf.mxu0
    %166 = vmatprep.mubr.bf16.mxu0 0
    %167 = vmatmul.mubr.bf16.gmra.mxu0 %v91
    %v168 = vpop.f32.mrf.mxu0
    %v169 = vadd.f32 %v63, %v168
    %v170 = vpop.f32.mrf.mxu0
    %v171 = vpop.f32.mrf.mxu0
    %v172 = vadd.f32 %v63, %v171
    %v173 = vpop.f32.mrf.mxu0
    %174 = vmatprep.mubr.bf16.mxu0 0
    %175 = vmatmul.mubr.bf16.gmra.mxu0 %v94
    %v176 = vpop.f32.mrf.mxu0
    %v177 = vadd.f32 %v63, %v176
    %v178 = vpop.f32.mrf.mxu0
    %v179 = vpop.f32.mrf.mxu0
    %v180 = vadd.f32 %v63, %v179
    %v181 = vpop.f32.mrf.mxu0
    %182 = vmatprep.mubr.bf16.mxu0 0
    %183 = vmatmul.mubr.bf16.gmra.mxu0 %v97
    %v184 = vpop.f32.mrf.mxu0
    %v185 = vadd.f32 %v63, %v184
    %v186 = vpop.f32.mrf.mxu0
    %v187 = vpop.f32.mrf.mxu0
    %v188 = vadd.f32 %v63, %v187
    %v189 = vpop.f32.mrf.mxu0
    %190 = vmatprep.mubr.bf16.mxu0 0
    %191 = vmatmul.mubr.bf16.gmra.mxu0 %v100
    %v192 = vpop.f32.mrf.mxu0
    %v193 = vadd.f32 %v63, %v192
    %v194 = vpop.f32.mrf.mxu0
    %v195 = vpop.f32.mrf.mxu0
    %v196 = vadd.f32 %v63, %v195
    %v197 = vpop.f32.mrf.mxu0
    %198 = vdwg.mxu0
    %v199 = vmax.f32 %v137, 0.0
    %v200 = vmax.f32 %v140, 0.0
    %v201 = vmax.f32 %v145, 0.0
    %v202 = vmax.f32 %v148, 0.0
    %v203 = vmax.f32 %v153, 0.0
    %v204 = vmax.f32 %v156, 0.0
    %v205 = vmax.f32 %v161, 0.0
    %v206 = vmax.f32 %v164, 0.0
    %v207 = vmax.f32 %v169, 0.0
    %v208 = vmax.f32 %v172, 0.0
    %v209 = vmax.f32 %v177, 0.0
    %v210 = vmax.f32 %v180, 0.0
    %v211 = vmax.f32 %v185, 0.0
    %v212 = vmax.f32 %v188, 0.0
    %v213 = vmax.f32 %v193, 0.0
    %v214 = vmax.f32 %v196, 0.0
    %v215 = vpack.c.bf16 %v200, %v199
    %v216 = vpack.c.bf16 %v202, %v201
    %v217 = vpack.c.bf16 %v204, %v203
    %v218 = vpack.c.bf16 %v206, %v205
    %v219 = vpack.c.bf16 %v208, %v207
    %v220 = vpack.c.bf16 %v210, %v209
    %v221 = vpack.c.bf16 %v212, %v211
    %v222 = vpack.c.bf16 %v214, %v213
    %v223 = vld [vmem:[%s3] sm:$0xf]
    %v224 = vld [vmem:[%s3 + $0x4] sm:$0xf]
    %v225 = vld [vmem:[%s3 + $0x8] sm:$0xf]
    %v226 = vld [vmem:[%s3 + $0xc] sm:$0xf]
    %v227 = vld [vmem:[%s3 + $0x10] sm:$0xf]
    %v228 = vld [vmem:[%s3 + $0x14] sm:$0xf]
    %v229 = vld [vmem:[%s3 + $0x18] sm:$0xf]
    %v230 = vld [vmem:[%s3 + $0x1c] sm:$0xf]
    %v231 = vld [vmem:[%s3 + $0x20] sm:$0xf]
    %v232 = vld [vmem:[%s3 + $0x24] sm:$0xf]
    %v233 = vld [vmem:[%s3 + $0x28] sm:$0xf]
    %v234 = vld [vmem:[%s3 + $0x2c] sm:$0xf]
    %v235 = vld [vmem:[%s3 + $0x30] sm:$0xf]
    %v236 = vld [vmem:[%s3 + $0x34] sm:$0xf]
    %v237 = vld [vmem:[%s3 + $0x38] sm:$0xf]
    %v238 = vld [vmem:[%s3 + $0x3c] sm:$0xf]
    %v239 = vld [vmem:[%s4] sm:$0x1]
    %v241 = vlaneseq
    %v242 = vshrl.u32 %v241, 7
    %v243 = vsub.s32 0, %v242
    %v244 = vrot.slane %v239, %v243
    %v262 = vunpack.c.l.b16 %v223
    %v263 = vunpack.c.l.b16 %v224
    %v264 = vunpack.c.l.b16 %v225
    %v265 = vunpack.c.l.b16 %v226
    %v266 = vunpack.c.l.b16 %v227
    %v267 = vunpack.c.l.b16 %v228
    %v268 = vunpack.c.l.b16 %v229
    %v269 = vunpack.c.l.b16 %v230
    %v270 = vunpack.c.l.b16 %v231
    %v271 = vunpack.c.l.b16 %v232
    %v272 = vunpack.c.l.b16 %v233
    %v273 = vunpack.c.l.b16 %v234
    %v274 = vunpack.c.l.b16 %v235
    %v275 = vunpack.c.l.b16 %v236
    %v276 = vunpack.c.l.b16 %v237
    %v277 = vunpack.c.l.b16 %v238
    %v278 = vpack.c.b16 %v263, %v262
    %v279 = vpack.c.b16 %v265, %v264
    %v280 = vpack.c.b16 %v267, %v266
    %v281 = vpack.c.b16 %v269, %v268
    %v282 = vpack.c.b16 %v271, %v270
    %v283 = vpack.c.b16 %v273, %v272
    %v284 = vpack.c.b16 %v275, %v274
    %v285 = vpack.c.b16 %v277, %v276
    %294 = vmatprep.subr.bf16.mxu0 0
    %295 = vmatpush1.bf16.msra.mxu0 %v285
    %296 = vmatprep.subr.bf16.mxu0 0
    %297 = vmatpush1.bf16.msra.mxu0 %v284
    %298 = vmatprep.subr.bf16.mxu0 0
    %299 = vmatpush1.bf16.msra.mxu0 %v283
    %300 = vmatprep.subr.bf16.mxu0 0
    %301 = vmatpush1.bf16.msra.mxu0 %v282
    %302 = vmatprep.subr.bf16.mxu0 0
    %303 = vmatpush1.bf16.msra.mxu0 %v281
    %304 = vmatprep.subr.bf16.mxu0 0
    %305 = vmatpush1.bf16.msra.mxu0 %v280
    %306 = vmatprep.subr.bf16.mxu0 0
    %307 = vmatpush1.bf16.msra.mxu0 %v279
    %308 = vmatprep.subr.bf16.mxu0 0
    %309 = vmatpush1.bf16.msra.mxu0 %v278
    %310 = vmatprep.subr.bf16.mxu0 0
    %311 = vmatpush2.bf16.msra.mxu0 0
    %312 = vmatprep.subr.bf16.mxu0 0
    %313 = vmatpush2.bf16.msra.mxu0 0
    %314 = vmatprep.subr.bf16.mxu0 0
    %315 = vmatpush2.bf16.msra.mxu0 0
    %316 = vmatprep.subr.bf16.mxu0 0
    %317 = vmatpush2.bf16.msra.mxu0 0
    %318 = vmatprep.subr.bf16.mxu0 0
    %319 = vmatpush2.bf16.msra.mxu0 0
    %320 = vmatprep.subr.bf16.mxu0 0
    %321 = vmatpush2.bf16.msra.mxu0 0
    %322 = vmatprep.subr.bf16.mxu0 0
    %323 = vmatpush2.bf16.msra.mxu0 0
    %324 = vmatprep.subr.bf16.mxu0 0
    %325 = vmatpush2.bf16.msra.mxu0 0
    %326 = vmatprep.mubr.bf16.mxu0 0
    %327 = vmatmul.mubr.bf16.gmra.mxu0 %v215
    %v328 = vpop.f32.mrf.mxu0
    %v329 = vadd.f32 %v244, %v328
    %v330 = vpop.f32.mrf.mxu0
    %v331 = vpop.f32.mrf.mxu0
    %v332 = vadd.f32 %v244, %v331
    %v333 = vpop.f32.mrf.mxu0
    %334 = vmatprep.mubr.bf16.mxu0 0
    %335 = vmatmul.mubr.bf16.gmra.mxu0 %v216
    %v336 = vpop.f32.mrf.mxu0
    %v337 = vadd.f32 %v244, %v336
    %v338 = vpop.f32.mrf.mxu0
    %v339 = vpop.f32.mrf.mxu0
    %v340 = vadd.f32 %v244, %v339
    %v341 = vpop.f32.mrf.mxu0
    %342 = vmatprep.mubr.bf16.mxu0 0
    %343 = vmatmul.mubr.bf16.gmra.mxu0 %v217
    %v344 = vpop.f32.mrf.mxu0
    %v345 = vadd.f32 %v244, %v344
    %v346 = vpop.f32.mrf.mxu0
    %v347 = vpop.f32.mrf.mxu0
    %v348 = vadd.f32 %v244, %v347
    %v349 = vpop.f32.mrf.mxu0
    %350 = vmatprep.mubr.bf16.mxu0 0
    %351 = vmatmul.mubr.bf16.gmra.mxu0 %v218
    %v352 = vpop.f32.mrf.mxu0
    %v353 = vadd.f32 %v244, %v352
    %v354 = vpop.f32.mrf.mxu0
    %v355 = vpop.f32.mrf.mxu0
    %v356 = vadd.f32 %v244, %v355
    %v357 = vpop.f32.mrf.mxu0
    %358 = vmatprep.mubr.bf16.mxu0 0
    %359 = vmatmul.mubr.bf16.gmra.mxu0 %v219
    %v360 = vpop.f32.mrf.mxu0
    %v361 = vadd.f32 %v244, %v360
    %v362 = vpop.f32.mrf.mxu0
    %v363 = vpop.f32.mrf.mxu0
    %v364 = vadd.f32 %v244, %v363
    %v365 = vpop.f32.mrf.mxu0
    %366 = vmatprep.mubr.bf16.mxu0 0
    %367 = vmatmul.mubr.bf16.gmra.mxu0 %v220
    %v368 = vpop.f32.mrf.mxu0
    %v369 = vadd.f32 %v244, %v368
    %v370 = vpop.f32.mrf.mxu0
    %v371 = vpop.f32.mrf.mxu0
    %v372 = vadd.f32 %v244, %v371
    %v373 = vpop.f32.mrf.mxu0
    %374 = vmatprep.mubr.bf16.mxu0 0
    %375 = vmatmul.mubr.bf16.gmra.mxu0 %v221
    %v376 = vpop.f32.mrf.mxu0
    %v377 = vadd.f32 %v244, %v376
    %v378 = vpop.f32.mrf.mxu0
    %v379 = vpop.f32.mrf.mxu0
    %v380 = vadd.f32 %v244, %v379
    %v381 = vpop.f32.mrf.mxu0
    %382 = vmatprep.mubr.bf16.mxu0 0
    %383 = vmatmul.mubr.bf16.gmra.mxu0 %v222
    %v384 = vpop.f32.mrf.mxu0
    %v385 = vadd.f32 %v244, %v384
    %v386 = vpop.f32.mrf.mxu0
    %v387 = vpop.f32.mrf.mxu0
    %v388 = vadd.f32 %v244, %v387
    %v389 = vpop.f32.mrf.mxu0
    %390 = vdwg.mxu0
    %v391 = vmax.f32 %v329, 0.0
    %v392 = vmax.f32 %v332, 0.0
    %v393 = vmax.f32 %v337, 0.0
    %v394 = vmax.f32 %v340, 0.0
    %v395 = vmax.f32 %v345, 0.0
    %v396 = vmax.f32 %v348, 0.0
    %v397 = vmax.f32 %v353, 0.0
    %v398 = vmax.f32 %v356, 0.0
    %v399 = vmax.f32 %v361, 0.0
    %v400 = vmax.f32 %v364, 0.0
    %v401 = vmax.f32 %v369, 0.0
    %v402 = vmax.f32 %v372, 0.0
    %v403 = vmax.f32 %v377, 0.0
    %v404 = vmax.f32 %v380, 0.0
    %v405 = vmax.f32 %v385, 0.0
    %v406 = vmax.f32 %v388, 0.0
    %v407 = vld [vmem:[%s5] sm:$0x1]
    %v408 = vld [vmem:[#allocation2] sm:$0x1]
    %410 = vset.pattern.permute.xlu0 0
    %411 = vperm.xlu0 %410, %v408
    %v412 = vpop.permute.xlu0 %411
    %v414 = vlaneseq
    %v415 = vshrl.u32 %v414, 7
    %v416 = vsub.s32 0, %v415
    %v417 = vrot.slane %v412, %v416
    %vm418 = vcmask 523264
    %v420 = vsel %vm418, %v407, 0
    %v423 = vsel %vm418, %v391, 0
    %v426 = vsel %vm418, %v392, 0
    %v429 = vsel %vm418, %v393, 0
    %v432 = vsel %vm418, %v394, 0
    %v435 = vsel %vm418, %v395, 0
    %v438 = vsel %vm418, %v396, 0
    %v441 = vsel %vm418, %v397, 0
    %v444 = vsel %vm418, %v398, 0
    %v447 = vsel %vm418, %v399, 0
    %v450 = vsel %vm418, %v400, 0
    %v453 = vsel %vm418, %v401, 0
    %v456 = vsel %vm418, %v402, 0
    %v459 = vsel %vm418, %v403, 0
    %v462 = vsel %vm418, %v404, 0
    %v465 = vsel %vm418, %v405, 0
    %v468 = vsel %vm418, %v406, 0
    %470 = vmatprep.subr.mxu0 0.0
    %471 = vmatpush1.xpose.msra.mxu0 %v468
    %472 = vmatprep.subr.mxu0 0.0
    %473 = vmatpush1.xpose.msra.mxu0 %v465
    %474 = vmatprep.subr.mxu0 0.0
    %475 = vmatpush1.xpose.msra.mxu0 %v462
    %476 = vmatprep.subr.mxu0 0.0
    %477 = vmatpush1.xpose.msra.mxu0 %v459
    %478 = vmatprep.subr.mxu0 0.0
    %479 = vmatpush1.xpose.msra.mxu0 %v456
    %480 = vmatprep.subr.mxu0 0.0
    %481 = vmatpush1.xpose.msra.mxu0 %v453
    %482 = vmatprep.subr.mxu0 0.0
    %483 = vmatpush1.xpose.msra.mxu0 %v450
    %484 = vmatprep.subr.mxu0 0.0
    %485 = vmatpush1.xpose.msra.mxu0 %v447
    %486 = vmatprep.subr.mxu0 0.0
    %487 = vmatpush1.xpose.msra.mxu0 %v444
    %488 = vmatprep.subr.mxu0 0.0
    %489 = vmatpush1.xpose.msra.mxu0 %v441
    %490 = vmatprep.subr.mxu0 0.0
    %491 = vmatpush1.xpose.msra.mxu0 %v438
    %492 = vmatprep.subr.mxu0 0.0
    %493 = vmatpush1.xpose.msra.mxu0 %v435
    %494 = vmatprep.subr.mxu0 0.0
    %495 = vmatpush1.xpose.msra.mxu0 %v432
    %496 = vmatprep.subr.mxu0 0.0
    %497 = vmatpush1.xpose.msra.mxu0 %v429
    %498 = vmatprep.subr.mxu0 0.0
    %499 = vmatpush1.xpose.msra.mxu0 %v426
    %500 = vmatprep.subr.mxu0 0.0
    %501 = vmatpush1.xpose.msra.mxu0 %v423
    %502 = vmatprep.subr.mxu0 0.0
    %503 = vmatpush2.xpose.msra.mxu0 0.0
    %504 = vmatprep.subr.mxu0 0.0
    %505 = vmatpush2.xpose.msra.mxu0 0.0
    %506 = vmatprep.subr.mxu0 0.0
    %507 = vmatpush2.xpose.msra.mxu0 0.0
    %508 = vmatprep.subr.mxu0 0.0
    %509 = vmatpush2.xpose.msra.mxu0 0.0
    %510 = vmatprep.subr.mxu0 0.0
    %511 = vmatpush2.xpose.msra.mxu0 0.0
    %512 = vmatprep.subr.mxu0 0.0
    %513 = vmatpush2.xpose.msra.mxu0 0.0
    %514 = vmatprep.subr.mxu0 0.0
    %515 = vmatpush2.xpose.msra.mxu0 0.0
    %516 = vmatprep.subr.mxu0 0.0
    %517 = vmatpush2.xpose.msra.mxu0 0.0
    %518 = vmatprep.subr.mxu0 0.0
    %519 = vmatpush2.xpose.msra.mxu0 0.0
    %520 = vmatprep.subr.mxu0 0.0
    %521 = vmatpush2.xpose.msra.mxu0 0.0
    %522 = vmatprep.subr.mxu0 0.0
    %523 = vmatpush2.xpose.msra.mxu0 0.0
    %524 = vmatprep.subr.mxu0 0.0
    %525 = vmatpush2.xpose.msra.mxu0 0.0
    %526 = vmatprep.subr.mxu0 0.0
    %527 = vmatpush2.xpose.msra.mxu0 0.0
    %528 = vmatprep.subr.mxu0 0.0
    %529 = vmatpush2.xpose.msra.mxu0 0.0
    %530 = vmatprep.subr.mxu0 0.0
    %531 = vmatpush2.xpose.msra.mxu0 0.0
    %532 = vmatprep.subr.mxu0 0.0
    %533 = vmatpush2.xpose.msra.mxu0 0.0
    %534 = vmatprep.mubr.f32.mxu0 0.0
    %535 = vmatmul.mubr.f32.gmra.mxu0 %v420
    %v536 = vpop.f32.mrf.mxu0
    %v537 = vadd.f32 %v417, %v536
    %v538 = vpop.f32.mrf.mxu0
    %539 = vdwg.mxu0
    %v540 = vxor.u32 %v537, 2147483648
    %v541 = vmul.f32 %v540, 1.442695
    %v542 = vpow.pop %v541
    %v543 = vadd.f32 %v542, 1.0
    %v544 = vrcp.pop %v543
    %v545 = vmul.f32 1.0, %v544
    %546 = vst [vmem:[#allocation3] sm:$0x1] %v545
    // Predicated region
    $region30: #{tpu_custom_call.1} parent=1 // pred_check
      _
    $region31: #{tpu_custom_call.1} parent=1 // pred_check_branch
      %548 = sbr.rel (0) target = $region33
    $region32: #{tpu_custom_call.1} parent=1 // pred_region
      %s550 = ssub.s32 16, 16
      %551 = vsyncadd [#allocation4], %s550
      %s553 = sshll.u32 [#allocation3], 4
      %s554 = int_to_ptr.vmem [resolvable:$true] %s553
      %556 = dma.vmem_to_hbm [thread:$0]  %s554, 16, %s7, [#allocation4]
    $region33: #{tpu_custom_call.1} parent=1 // pred_fallthru
      _
    // Predicated region
    $region34: #{tpu_custom_call.1} parent=1 // pred_check
      _
    $region35: #{tpu_custom_call.1} parent=1 // pred_check_branch
      %558 = sbr.rel (0) target = $region37
    $region36: #{tpu_custom_call.1} parent=1 // pred_region
      %559 = dma.done [#allocation4], 16
    $region37: #{tpu_custom_call.1} parent=1 // pred_fallthru
      _
    %560 = vsyncpa [#allocation4], 1

</llo_original>
